<compile_context>
chip_gen: v6e
topology: v6e:2x2x1
jax: 0.10.0
libtpu: 0.0.40
codegen_flags: <defaults>
</compile_context>

<pallas_src>
import functools

import jax
import jax.numpy as jnp
from jax.experimental import pallas as pl
from jax.experimental.pallas import tpu as pltpu


def _fused_mlp_kernel(*refs, num_layers: int):
    """refs = (x_ref, w0, b0, w1, b1, ..., w_{L-1}, b_{L-1}, o_ref).

    ReLU after every layer except the last. All intermediate activations stay
    on-chip; accumulation is f32; one cast to o_ref.dtype at the end.
    """
    x_ref = refs[0]
    o_ref = refs[-1]
    params = refs[1:-1]
    assert len(params) == 2 * num_layers

    act = x_ref[...].astype(jnp.float32)
    for i in range(num_layers):
        w = params[2 * i][...].astype(jnp.float32)
        b = params[2 * i + 1][...].astype(jnp.float32)
        act = jnp.dot(act, w, preferred_element_type=jnp.float32) + b
        if i < num_layers - 1:           # hidden layers get ReLU; final does not
            act = jnp.maximum(act, 0.0)
    o_ref[...] = act.astype(o_ref.dtype)


def _round_up(n, m):
    return ((n + m - 1) // m) * m


def mlp_forward_pallas(x, layers):
    """Fused forward: layers is a list of (w [Din,Dout], b [1,Dout]).

    ReLU is applied after every layer except the last (matching
    LinearClassifier). Single pallas_call, no grid; all operands live in VMEM.
    """
    B, _ = x.shape
    out_dim = layers[-1][0].shape[1]

    # Lane-dense final store: pad the last layer's output dim up to a multiple
    # of 128 with zero columns / zero bias (exact: padded outputs are 0), then
    # slice the padding off after the kernel.
    dout_pad = _round_up(out_dim, 128)
    w_last, b_last = layers[-1]
    if dout_pad != out_dim:
        w_last = jnp.pad(w_last, ((0, 0), (0, dout_pad - out_dim)))
        b_last = jnp.pad(b_last, ((0, 0), (0, dout_pad - out_dim)))
    padded_layers = list(layers[:-1]) + [(w_last, b_last)]

    flat_params = []
    for w, b in padded_layers:
        flat_params.extend((w, b))

    kernel = functools.partial(_fused_mlp_kernel, num_layers=len(padded_layers))
    vmem_spec = pl.BlockSpec(memory_space=pltpu.MemorySpace.VMEM)

    out_padded = pl.pallas_call(
        kernel,
        out_shape=jax.ShapeDtypeStruct((B, dout_pad), x.dtype),
        in_specs=[vmem_spec] * (1 + len(flat_params)),
        out_specs=vmem_spec,
    )(x, *flat_params)

    return out_padded[:, :out_dim]


def init_linear_params(key, in_features, out_features, dtype=jnp.float32):
    """Mirror torch.nn.Linear default init: U(-k, k), k = 1/sqrt(fan_in)."""
    k_w, k_b = jax.random.split(key)
    bound = 1.0 / (in_features ** 0.5)
    # stored as [in, out] so the kernel computes x @ W
    w = jax.random.uniform(k_w, (in_features, out_features), dtype,
                           minval=-bound, maxval=bound)
    b = jax.random.uniform(k_b, (1, out_features), dtype,
                           minval=-bound, maxval=bound)
    return w, b


class LinearClassifierPallas:
    """Matches the PyTorch LinearClassifier forward semantics."""

    def __init__(self, in_dim, h_dim, out_dim, hlayer_num, key):
        self.layers = []  # list of (w, b); ReLU after all but the last
        keys = jax.random.split(key, max(hlayer_num, 0) + 1)
        for idx in range(hlayer_num):
            d_in = in_dim if idx == 0 else h_dim
            self.layers.append(init_linear_params(keys[idx], d_in, h_dim))
        last_in = in_dim if hlayer_num == 0 else h_dim  # "if len(layers)==0: h_dim=in_dim"
        self.layers.append(init_linear_params(keys[-1], last_in, out_dim))

    def __call__(self, x):
        return mlp_forward_pallas(x, self.layers)


def reference_forward(model: LinearClassifierPallas, x):
    out = x
    n = len(model.layers)
    for i, (w, b) in enumerate(model.layers):
        out = out @ w + b
        if i < n - 1:
            out = jnp.maximum(out, 0.0)
    return out


if __name__ == "__main__":
    key = jax.random.PRNGKey(0)
    k_x, k_params, k_params0 = jax.random.split(key, 3)

    batch, in_dim, h_dim, out_dim, hlayer_num = 8, 32, 32, 8, 2
    x = jax.random.normal(k_x, (batch, in_dim), dtype=jnp.float32)

    # hlayer_num = 2 (two hidden Linear+ReLU layers + final Linear)
    model = LinearClassifierPallas(in_dim, h_dim, out_dim, hlayer_num, k_params)
    out = jax.block_until_ready(model(x))
    ref = reference_forward(model, x)
    assert out.shape == (batch, out_dim), out.shape
    assert jnp.allclose(out, ref, atol=1e-5, rtol=1e-5), "mismatch vs reference"

    # hlayer_num = 0 edge case (single Linear in_dim -> out_dim)
    model0 = LinearClassifierPallas(in_dim, h_dim, out_dim, 0, k_params0)
    out0 = jax.block_until_ready(model0(x))
    ref0 = reference_forward(model0, x)
    assert out0.shape == (batch, out_dim), out0.shape
    assert jnp.allclose(out0, ref0, atol=1e-5, rtol=1e-5), "mismatch vs reference (0 hidden)"

    print("KERNEL_OK")
</pallas_src>

<mosaic_0001>
module attributes {stable_mosaic.version = 11 : i64} {
  func.func @_fused_mlp_kernel(%arg0: memref<8x32xf32, #tpu.memory_space<vmem>>, %arg1: memref<32x32xf32, #tpu.memory_space<vmem>>, %arg2: memref<1x32xf32, #tpu.memory_space<vmem>>, %arg3: memref<32x32xf32, #tpu.memory_space<vmem>>, %arg4: memref<1x32xf32, #tpu.memory_space<vmem>>, %arg5: memref<32x128xf32, #tpu.memory_space<vmem>>, %arg6: memref<1x128xf32, #tpu.memory_space<vmem>>, %arg7: memref<8x128xf32, #tpu.memory_space<vmem>>) attributes {dimension_semantics = [], scalar_prefetch = 0 : i64, scratch_operands = 0 : i64, tpu.core_type = #tpu.core_type<tc>} {
    %c0 = arith.constant 0 : index
    %c0_0 = arith.constant 0 : index
    %0 = vector.load %arg0[%c0, %c0_0] : memref<8x32xf32, #tpu.memory_space<vmem>>, vector<8x32xf32>
    %c0_1 = arith.constant 0 : index
    %c0_2 = arith.constant 0 : index
    %1 = vector.load %arg1[%c0_1, %c0_2] : memref<32x32xf32, #tpu.memory_space<vmem>>, vector<32x32xf32>
    %c0_3 = arith.constant 0 : index
    %c0_4 = arith.constant 0 : index
    %2 = vector.load %arg2[%c0_3, %c0_4] : memref<1x32xf32, #tpu.memory_space<vmem>>, vector<1x32xf32>
    %cst = arith.constant dense<0.000000e+00> : vector<8x32xf32>
    %3 = tpu.matmul %0, %1, %cst {dimension_numbers = #tpu.dot_dimension_numbers<[1], [0], [0], [1], [0, 0, 1, 1], [], []>} : vector<8x32xf32>, vector<32x32xf32>, vector<8x32xf32> -> vector<8x32xf32>
    %4 = vector.broadcast %2 : vector<1x32xf32> to vector<8x32xf32>
    %5 = arith.addf %3, %4 : vector<8x32xf32>
    %cst_5 = arith.constant 0.000000e+00 : f32
    %6 = vector.broadcast %cst_5 : f32 to vector<8x32xf32>
    %7 = arith.maximumf %5, %6 : vector<8x32xf32>
    %c0_6 = arith.constant 0 : index
    %c0_7 = arith.constant 0 : index
    %8 = vector.load %arg3[%c0_6, %c0_7] : memref<32x32xf32, #tpu.memory_space<vmem>>, vector<32x32xf32>
    %c0_8 = arith.constant 0 : index
    %c0_9 = arith.constant 0 : index
    %9 = vector.load %arg4[%c0_8, %c0_9] : memref<1x32xf32, #tpu.memory_space<vmem>>, vector<1x32xf32>
    %cst_10 = arith.constant dense<0.000000e+00> : vector<8x32xf32>
    %10 = tpu.matmul %7, %8, %cst_10 {dimension_numbers = #tpu.dot_dimension_numbers<[1], [0], [0], [1], [0, 0, 1, 1], [], []>} : vector<8x32xf32>, vector<32x32xf32>, vector<8x32xf32> -> vector<8x32xf32>
    %11 = vector.broadcast %9 : vector<1x32xf32> to vector<8x32xf32>
    %12 = arith.addf %10, %11 : vector<8x32xf32>
    %cst_11 = arith.constant 0.000000e+00 : f32
    %13 = vector.broadcast %cst_11 : f32 to vector<8x32xf32>
    %14 = arith.maximumf %12, %13 : vector<8x32xf32>
    %c0_12 = arith.constant 0 : index
    %c0_13 = arith.constant 0 : index
    %15 = vector.load %arg5[%c0_12, %c0_13] : memref<32x128xf32, #tpu.memory_space<vmem>>, vector<32x128xf32>
    %c0_14 = arith.constant 0 : index
    %c0_15 = arith.constant 0 : index
    %16 = vector.load %arg6[%c0_14, %c0_15] : memref<1x128xf32, #tpu.memory_space<vmem>>, vector<1x128xf32>
    %cst_16 = arith.constant dense<0.000000e+00> : vector<8x128xf32>
    %17 = tpu.matmul %14, %15, %cst_16 {dimension_numbers = #tpu.dot_dimension_numbers<[1], [0], [0], [1], [0, 0, 1, 1], [], []>} : vector<8x32xf32>, vector<32x128xf32>, vector<8x128xf32> -> vector<8x128xf32>
    %18 = vector.broadcast %16 : vector<1x128xf32> to vector<8x128xf32>
    %19 = arith.addf %17, %18 : vector<8x128xf32>
    %c0_17 = arith.constant 0 : index
    %c0_18 = arith.constant 0 : index
    %20 = vector.load %arg7[%c0_17, %c0_18] : memref<8x128xf32, #tpu.memory_space<vmem>>, vector<8x128xf32>
    tpu.vector_store %arg7[%c0_17, %c0_18], %19 {strides = array<i32>} : memref<8x128xf32, #tpu.memory_space<vmem>>, vector<8x128xf32>,
    return
  }
}

</mosaic_0001>

<llo_original>
// kernel: tpu_custom_call.1
$region0: #{tpu_custom_call.1}
  #allocation0 [shape = 'u32[]', space=smem, size = 0x4, offset = 0x4, fixed_abs, tag = 'smem constant byte address 0x4 - core index']
  #allocation1 [shape = 'u32[144,128]{1,0:T(1,128)}', space=vmem, size = 0x12000, scoped, tag = 'internal scratch']
  %s0 = inlined_call_operand.hbm [shape: f32[8,32], index: 0, kind: input, shape index: {}]
  %s1 = inlined_call_operand.hbm [shape: f32[32,32], index: 1, kind: input, shape index: {}]
  %s2 = inlined_call_operand.vmem [shape: f32[1,32], index: 2, kind: input, shape index: {}]
  %s3 = inlined_call_operand.hbm [shape: f32[32,32], index: 3, kind: input, shape index: {}]
  %s4 = inlined_call_operand.vmem [shape: f32[1,32], index: 4, kind: input, shape index: {}]
  %s5 = inlined_call_operand.hbm [shape: f32[32,128], index: 5, kind: input, shape index: {}]
  %s6 = inlined_call_operand.vmem [shape: f32[1,128], index: 6, kind: input, shape index: {}]
  %s7 = inlined_call_operand.hbm [shape: f32[8,128], index: 7, kind: output, shape index: {}]
  %s8 = sld [smem:[#allocation0]]
  $region54: #{tpu_custom_call.1} parent=0
    _
  %s10 = ssub.s32 1, %s8
  %s11 = scalar_select 0, %s10, %s8
  $region1: #{tpu_custom_call.1} parent=0
    #allocation2 [shape = 'u8[4096]{0}', space=vmem, size = 0x1000, scoped, tag = 'input window, operand 0, single buffered']
    #allocation3 [shape = 's32[1]{0}', space=sflag, size = 0x4, scoped, tag = 'scoped memory for tpu_custom_call.1']
    #allocation4 [shape = 's32[1]{0}', space=sflag, size = 0x4, scoped, tag = 'scoped memory for tpu_custom_call.1']
    #allocation5 [shape = 'u8[16384]{0}', space=vmem, size = 0x4000, scoped, tag = 'input window, operand 1, single buffered']
    #allocation6 [shape = 's32[1]{0}', space=sflag, size = 0x4, scoped, tag = 'scoped memory for tpu_custom_call.1']
    #allocation7 [shape = 'u8[16384]{0}', space=vmem, size = 0x4000, scoped, tag = 'input window, operand 3, single buffered']
    #allocation8 [shape = 'u8[16384]{0}', space=vmem, size = 0x4000, scoped, tag = 'input window, operand 5, single buffered']
    #allocation9 [shape = 's32[1]{0}', space=sflag, size = 0x4, scoped, tag = 'scoped memory for tpu_custom_call.1']
    #allocation10 [shape = 'u8[4096]{0}', space=vmem, size = 0x1000, scoped, tag = 'output window, operand 0, single buffered']
    %12 = vsyncpa [#allocation3], 0
    %13 = vsyncpa [#allocation6], 0
    %14 = vsyncpa [#allocation9], 0
    %15 = vsyncpa [#allocation4], 0
    // Predicated region
    $region2: #{tpu_custom_call.1} parent=1 // pred_check
      _
    $region3: #{tpu_custom_call.1} parent=1 // pred_check_branch
      %17 = sbr.rel (0) target = $region5
    $region4: #{tpu_custom_call.1} parent=1 // pred_region
      %s19 = ssub.s32 128, 128
      %20 = vsyncadd [#allocation3], %s19
      %s22 = sshll.u32 [#allocation2], 4
      %s23 = int_to_ptr.vmem [resolvable:$true] %s22
      %25 = dma.hbm_to_vmem [thread:$0]  %s0, 128, %s23, [#allocation3]
    $region5: #{tpu_custom_call.1} parent=1 // pred_fallthru
      _
    // Predicated region
    $region6: #{tpu_custom_call.1} parent=1 // pred_check
      _
    $region7: #{tpu_custom_call.1} parent=1 // pred_check_branch
      %27 = sbr.rel (0) target = $region9
    $region8: #{tpu_custom_call.1} parent=1 // pred_region
      %s29 = ssub.s32 512, 512
      %30 = vsyncadd [#allocation6], %s29
      %s31 = sshll.u32 [#allocation5], 4
      %s32 = int_to_ptr.vmem [resolvable:$true] %s31
      %37 = dma.hbm_to_vmem [thread:$0]  %s1, 512, %s32, [#allocation6], 128, 128, 8
    $region9: #{tpu_custom_call.1} parent=1 // pred_fallthru
      _
    // Predicated region
    $region10: #{tpu_custom_call.1} parent=1 // pred_check
      _
    $region11: #{tpu_custom_call.1} parent=1 // pred_check_branch
      %39 = sbr.rel (0) target = $region13
    $region12: #{tpu_custom_call.1} parent=1 // pred_region
      _
    $region13: #{tpu_custom_call.1} parent=1 // pred_fallthru
      _
    // Predicated region
    $region14: #{tpu_custom_call.1} parent=1 // pred_check
      _
    $region15: #{tpu_custom_call.1} parent=1 // pred_check_branch
      %41 = sbr.rel (0) target = $region17
    $region16: #{tpu_custom_call.1} parent=1 // pred_region
      %s43 = ssub.s32 512, 512
      %44 = vsyncadd [#allocation6], %s43
      %s45 = sshll.u32 [#allocation7], 4
      %s46 = int_to_ptr.vmem [resolvable:$true] %s45
      %51 = dma.hbm_to_vmem [thread:$0]  %s3, 512, %s46, [#allocation6], 128, 128, 8
    $region17: #{tpu_custom_call.1} parent=1 // pred_fallthru
      _
    // Predicated region
    $region18: #{tpu_custom_call.1} parent=1 // pred_check
      _
    $region19: #{tpu_custom_call.1} parent=1 // pred_check_branch
      %53 = sbr.rel (0) target = $region21
    $region20: #{tpu_custom_call.1} parent=1 // pred_region
      _
    $region21: #{tpu_custom_call.1} parent=1 // pred_fallthru
      _
    // Predicated region
    $region22: #{tpu_custom_call.1} parent=1 // pred_check
      _
    $region23: #{tpu_custom_call.1} parent=1 // pred_check_branch
      %55 = sbr.rel (0) target = $region25
    $region24: #{tpu_custom_call.1} parent=1 // pred_region
      %s57 = ssub.s32 512, 512
      %58 = vsyncadd [#allocation9], %s57
      %s59 = sshll.u32 [#allocation8], 4
      %s60 = int_to_ptr.vmem [resolvable:$true] %s59
      %65 = dma.hbm_to_vmem [thread:$0]  %s5, 512, %s60, [#allocation9], 128, 128, 8
    $region25: #{tpu_custom_call.1} parent=1 // pred_fallthru
      _
    // Predicated region
    $region26: #{tpu_custom_call.1} parent=1 // pred_check
      _
    $region27: #{tpu_custom_call.1} parent=1 // pred_check_branch
      %67 = sbr.rel (0) target = $region29
    $region28: #{tpu_custom_call.1} parent=1 // pred_region
      _
    $region29: #{tpu_custom_call.1} parent=1 // pred_fallthru
      _
    // Predicated region
    $region30: #{tpu_custom_call.1} parent=1 // pred_check
      _
    $region31: #{tpu_custom_call.1} parent=1 // pred_check_branch
      %69 = sbr.rel (0) target = $region33
    $region32: #{tpu_custom_call.1} parent=1 // pred_region
      %70 = dma.done [#allocation3], 128
    $region33: #{tpu_custom_call.1} parent=1 // pred_fallthru
      _
    // Predicated region
    $region34: #{tpu_custom_call.1} parent=1 // pred_check
      _
    $region35: #{tpu_custom_call.1} parent=1 // pred_check_branch
      %72 = sbr.rel (0) target = $region37
    $region36: #{tpu_custom_call.1} parent=1 // pred_region
      %73 = dma.done [#allocation6], 512
    $region37: #{tpu_custom_call.1} parent=1 // pred_fallthru
      _
    // Predicated region
    $region38: #{tpu_custom_call.1} parent=1 // pred_check
      _
    $region39: #{tpu_custom_call.1} parent=1 // pred_check_branch
      %75 = sbr.rel (0) target = $region41
    $region40: #{tpu_custom_call.1} parent=1 // pred_region
      %76 = dma.done [#allocation6], 512
    $region41: #{tpu_custom_call.1} parent=1 // pred_fallthru
      _
    // Predicated region
    $region42: #{tpu_custom_call.1} parent=1 // pred_check
      _
    $region43: #{tpu_custom_call.1} parent=1 // pred_check_branch
      %78 = sbr.rel (0) target = $region45
    $region44: #{tpu_custom_call.1} parent=1 // pred_region
      %79 = dma.done [#allocation9], 512
    $region45: #{tpu_custom_call.1} parent=1 // pred_fallthru
      _
    %v80 = vld [vmem:[#allocation2] sm:$0xff]
    %v81 = vld [vmem:[#allocation5] sm:$0xff]
    %v82 = vld [vmem:[#allocation5 + $0x8] sm:$0xff]
    %v83 = vld [vmem:[#allocation5 + $0x10] sm:$0xff]
    %v84 = vld [vmem:[#allocation5 + $0x18] sm:$0xff]
    %v85 = vld [vmem:[%s2] sm:$0x1]
    %v87 = vlaneseq
    %v88 = vshrl.u32 %v87, 7
    %v89 = vsub.s32 0, %v88
    %v90 = vrot.slane %v85, %v89
    %vm92 = vcmask 261120
    %v94 = vsel %vm92, %v80, 0
    %96 = vmatprep.subr.mxu0 0.0
    %97 = vmatpush1.msra.mxu0 0.0
    %98 = vmatprep.subr.mxu0 0.0
    %99 = vmatpush1.msra.mxu0 0.0
    %100 = vmatprep.subr.mxu0 0.0
    %101 = vmatpush1.msra.mxu0 0.0
    %102 = vmatprep.subr.mxu0 0.0
    %103 = vmatpush1.msra.mxu0 0.0
    %104 = vmatprep.subr.mxu0 0.0
    %105 = vmatpush1.msra.mxu0 0.0
    %106 = vmatprep.subr.mxu0 0.0
    %107 = vmatpush1.msra.mxu0 0.0
    %108 = vmatprep.subr.mxu0 0.0
    %109 = vmatpush1.msra.mxu0 0.0
    %110 = vmatprep.subr.mxu0 0.0
    %111 = vmatpush1.msra.mxu0 0.0
    %112 = vmatprep.subr.mxu0 0.0
    %113 = vmatpush1.msra.mxu0 0.0
    %114 = vmatprep.subr.mxu0 0.0
    %115 = vmatpush1.msra.mxu0 0.0
    %116 = vmatprep.subr.mxu0 0.0
    %117 = vmatpush1.msra.mxu0 0.0
    %118 = vmatprep.subr.mxu0 0.0
    %119 = vmatpush1.msra.mxu0 0.0
    %120 = vmatprep.subr.mxu0 0.0
    %121 = vmatpush1.msra.mxu0 %v84
    %122 = vmatprep.subr.mxu0 0.0
    %123 = vmatpush1.msra.mxu0 %v83
    %124 = vmatprep.subr.mxu0 0.0
    %125 = vmatpush1.msra.mxu0 %v82
    %126 = vmatprep.subr.mxu0 0.0
    %127 = vmatpush1.msra.mxu0 %v81
    %128 = vmatprep.subr.mxu0 0.0
    %129 = vmatpush2.msra.mxu0 0.0
    %130 = vmatprep.subr.mxu0 0.0
    %131 = vmatpush2.msra.mxu0 0.0
    %132 = vmatprep.subr.mxu0 0.0
    %133 = vmatpush2.msra.mxu0 0.0
    %134 = vmatprep.subr.mxu0 0.0
    %135 = vmatpush2.msra.mxu0 0.0
    %136 = vmatprep.subr.mxu0 0.0
    %137 = vmatpush2.msra.mxu0 0.0
    %138 = vmatprep.subr.mxu0 0.0
    %139 = vmatpush2.msra.mxu0 0.0
    %140 = vmatprep.subr.mxu0 0.0
    %141 = vmatpush2.msra.mxu0 0.0
    %142 = vmatprep.subr.mxu0 0.0
    %143 = vmatpush2.msra.mxu0 0.0
    %144 = vmatprep.subr.mxu0 0.0
    %145 = vmatpush2.msra.mxu0 0.0
    %146 = vmatprep.subr.mxu0 0.0
    %147 = vmatpush2.msra.mxu0 0.0
    %148 = vmatprep.subr.mxu0 0.0
    %149 = vmatpush2.msra.mxu0 0.0
    %150 = vmatprep.subr.mxu0 0.0
    %151 = vmatpush2.msra.mxu0 0.0
    %152 = vmatprep.subr.mxu0 0.0
    %153 = vmatpush2.msra.mxu0 0.0
    %154 = vmatprep.subr.mxu0 0.0
    %155 = vmatpush2.msra.mxu0 0.0
    %156 = vmatprep.subr.mxu0 0.0
    %157 = vmatpush2.msra.mxu0 0.0
    %158 = vmatprep.subr.mxu0 0.0
    %159 = vmatpush2.msra.mxu0 0.0
    %160 = vmatprep.mubr.f32.mxu0 0.0
    %161 = vmatmul.mubr.f32.gmra.mxu0 %v94
    %v162 = vpop.f32.mrf.mxu0
    %v163 = vadd.f32 %v90, %v162
    %v164 = vpop.f32.mrf.mxu0
    %165 = vdwg.mxu0
    %v166 = vmax.f32 %v163, 0.0
    %v167 = vld [vmem:[#allocation7] sm:$0xff]
    %v168 = vld [vmem:[#allocation7 + $0x8] sm:$0xff]
    %v169 = vld [vmem:[#allocation7 + $0x10] sm:$0xff]
    %v170 = vld [vmem:[#allocation7 + $0x18] sm:$0xff]
    %v171 = vld [vmem:[%s4] sm:$0x1]
    %v173 = vlaneseq
    %v174 = vshrl.u32 %v173, 7
    %v175 = vsub.s32 0, %v174
    %v176 = vrot.slane %v171, %v175
    %v179 = vsel %vm92, %v166, 0
    %181 = vmatprep.subr.mxu0 0.0
    %182 = vmatpush1.msra.mxu0 0.0
    %183 = vmatprep.subr.mxu0 0.0
    %184 = vmatpush1.msra.mxu0 0.0
    %185 = vmatprep.subr.mxu0 0.0
    %186 = vmatpush1.msra.mxu0 0.0
    %187 = vmatprep.subr.mxu0 0.0
    %188 = vmatpush1.msra.mxu0 0.0
    %189 = vmatprep.subr.mxu0 0.0
    %190 = vmatpush1.msra.mxu0 0.0
    %191 = vmatprep.subr.mxu0 0.0
    %192 = vmatpush1.msra.mxu0 0.0
    %193 = vmatprep.subr.mxu0 0.0
    %194 = vmatpush1.msra.mxu0 0.0
    %195 = vmatprep.subr.mxu0 0.0
    %196 = vmatpush1.msra.mxu0 0.0
    %197 = vmatprep.subr.mxu0 0.0
    %198 = vmatpush1.msra.mxu0 0.0
    %199 = vmatprep.subr.mxu0 0.0
    %200 = vmatpush1.msra.mxu0 0.0
    %201 = vmatprep.subr.mxu0 0.0
    %202 = vmatpush1.msra.mxu0 0.0
    %203 = vmatprep.subr.mxu0 0.0
    %204 = vmatpush1.msra.mxu0 0.0
    %205 = vmatprep.subr.mxu0 0.0
    %206 = vmatpush1.msra.mxu0 %v170
    %207 = vmatprep.subr.mxu0 0.0
    %208 = vmatpush1.msra.mxu0 %v169
    %209 = vmatprep.subr.mxu0 0.0
    %210 = vmatpush1.msra.mxu0 %v168
    %211 = vmatprep.subr.mxu0 0.0
    %212 = vmatpush1.msra.mxu0 %v167
    %213 = vmatprep.subr.mxu0 0.0
    %214 = vmatpush2.msra.mxu0 0.0
    %215 = vmatprep.subr.mxu0 0.0
    %216 = vmatpush2.msra.mxu0 0.0
    %217 = vmatprep.subr.mxu0 0.0
    %218 = vmatpush2.msra.mxu0 0.0
    %219 = vmatprep.subr.mxu0 0.0
    %220 = vmatpush2.msra.mxu0 0.0
    %221 = vmatprep.subr.mxu0 0.0
    %222 = vmatpush2.msra.mxu0 0.0
    %223 = vmatprep.subr.mxu0 0.0
    %224 = vmatpush2.msra.mxu0 0.0
    %225 = vmatprep.subr.mxu0 0.0
    %226 = vmatpush2.msra.mxu0 0.0
    %227 = vmatprep.subr.mxu0 0.0
    %228 = vmatpush2.msra.mxu0 0.0
    %229 = vmatprep.subr.mxu0 0.0
    %230 = vmatpush2.msra.mxu0 0.0
    %231 = vmatprep.subr.mxu0 0.0
    %232 = vmatpush2.msra.mxu0 0.0
    %233 = vmatprep.subr.mxu0 0.0
    %234 = vmatpush2.msra.mxu0 0.0
    %235 = vmatprep.subr.mxu0 0.0
    %236 = vmatpush2.msra.mxu0 0.0
    %237 = vmatprep.subr.mxu0 0.0
    %238 = vmatpush2.msra.mxu0 0.0
    %239 = vmatprep.subr.mxu0 0.0
    %240 = vmatpush2.msra.mxu0 0.0
    %241 = vmatprep.subr.mxu0 0.0
    %242 = vmatpush2.msra.mxu0 0.0
    %243 = vmatprep.subr.mxu0 0.0
    %244 = vmatpush2.msra.mxu0 0.0
    %245 = vmatprep.mubr.f32.mxu0 0.0
    %246 = vmatmul.mubr.f32.gmra.mxu0 %v179
    %v247 = vpop.f32.mrf.mxu0
    %v248 = vadd.f32 %v176, %v247
    %v249 = vpop.f32.mrf.mxu0
    %250 = vdwg.mxu0
    %v251 = vmax.f32 %v248, 0.0
    %v252 = vld [vmem:[#allocation8] sm:$0xff]
    %v253 = vld [vmem:[#allocation8 + $0x8] sm:$0xff]
    %v254 = vld [vmem:[#allocation8 + $0x10] sm:$0xff]
    %v255 = vld [vmem:[#allocation8 + $0x18] sm:$0xff]
    %v256 = vld [vmem:[%s6] sm:$0x1]
    %v258 = vlaneseq
    %v259 = vshrl.u32 %v258, 7
    %v260 = vsub.s32 0, %v259
    %v261 = vrot.slane %v256, %v260
    %v264 = vsel %vm92, %v251, 0
    %266 = vmatprep.subr.mxu0 0.0
    %267 = vmatpush1.msra.mxu0 0.0
    %268 = vmatprep.subr.mxu0 0.0
    %269 = vmatpush1.msra.mxu0 0.0
    %270 = vmatprep.subr.mxu0 0.0
    %271 = vmatpush1.msra.mxu0 0.0
    %272 = vmatprep.subr.mxu0 0.0
    %273 = vmatpush1.msra.mxu0 0.0
    %274 = vmatprep.subr.mxu0 0.0
    %275 = vmatpush1.msra.mxu0 0.0
    %276 = vmatprep.subr.mxu0 0.0
    %277 = vmatpush1.msra.mxu0 0.0
    %278 = vmatprep.subr.mxu0 0.0
    %279 = vmatpush1.msra.mxu0 0.0
    %280 = vmatprep.subr.mxu0 0.0
    %281 = vmatpush1.msra.mxu0 0.0
    %282 = vmatprep.subr.mxu0 0.0
    %283 = vmatpush1.msra.mxu0 0.0
    %284 = vmatprep.subr.mxu0 0.0
    %285 = vmatpush1.msra.mxu0 0.0
    %286 = vmatprep.subr.mxu0 0.0
    %287 = vmatpush1.msra.mxu0 0.0
    %288 = vmatprep.subr.mxu0 0.0
    %289 = vmatpush1.msra.mxu0 0.0
    %290 = vmatprep.subr.mxu0 0.0
    %291 = vmatpush1.msra.mxu0 %v255
    %292 = vmatprep.subr.mxu0 0.0
    %293 = vmatpush1.msra.mxu0 %v254
    %294 = vmatprep.subr.mxu0 0.0
    %295 = vmatpush1.msra.mxu0 %v253
    %296 = vmatprep.subr.mxu0 0.0
    %297 = vmatpush1.msra.mxu0 %v252
    %298 = vmatprep.subr.mxu0 0.0
    %299 = vmatpush2.msra.mxu0 0.0
    %300 = vmatprep.subr.mxu0 0.0
    %301 = vmatpush2.msra.mxu0 0.0
    %302 = vmatprep.subr.mxu0 0.0
    %303 = vmatpush2.msra.mxu0 0.0
    %304 = vmatprep.subr.mxu0 0.0
    %305 = vmatpush2.msra.mxu0 0.0
    %306 = vmatprep.subr.mxu0 0.0
    %307 = vmatpush2.msra.mxu0 0.0
    %308 = vmatprep.subr.mxu0 0.0
    %309 = vmatpush2.msra.mxu0 0.0
    %310 = vmatprep.subr.mxu0 0.0
    %311 = vmatpush2.msra.mxu0 0.0
    %312 = vmatprep.subr.mxu0 0.0
    %313 = vmatpush2.msra.mxu0 0.0
    %314 = vmatprep.subr.mxu0 0.0
    %315 = vmatpush2.msra.mxu0 0.0
    %316 = vmatprep.subr.mxu0 0.0
    %317 = vmatpush2.msra.mxu0 0.0
    %318 = vmatprep.subr.mxu0 0.0
    %319 = vmatpush2.msra.mxu0 0.0
    %320 = vmatprep.subr.mxu0 0.0
    %321 = vmatpush2.msra.mxu0 0.0
    %322 = vmatprep.subr.mxu0 0.0
    %323 = vmatpush2.msra.mxu0 0.0
    %324 = vmatprep.subr.mxu0 0.0
    %325 = vmatpush2.msra.mxu0 0.0
    %326 = vmatprep.subr.mxu0 0.0
    %327 = vmatpush2.msra.mxu0 0.0
    %328 = vmatprep.subr.mxu0 0.0
    %329 = vmatpush2.msra.mxu0 0.0
    %330 = vmatprep.mubr.f32.mxu0 0.0
    %331 = vmatmul.mubr.f32.gmra.mxu0 %v264
    %v332 = vpop.f32.mrf.mxu0
    %v333 = vadd.f32 %v261, %v332
    %v334 = vpop.f32.mrf.mxu0
    %335 = vdwg.mxu0
    %336 = vst [vmem:[#allocation10] sm:$0xff] %v333
    // Predicated region
    $region46: #{tpu_custom_call.1} parent=1 // pred_check
      _
    $region47: #{tpu_custom_call.1} parent=1 // pred_check_branch
      %338 = sbr.rel (0) target = $region49
    $region48: #{tpu_custom_call.1} parent=1 // pred_region
      %s340 = ssub.s32 128, 128
      %341 = vsyncadd [#allocation4], %s340
      %s343 = sshll.u32 [#allocation10], 4
      %s344 = int_to_ptr.vmem [resolvable:$true] %s343
      %346 = dma.vmem_to_hbm [thread:$0]  %s344, 128, %s7, [#allocation4]
    $region49: #{tpu_custom_call.1} parent=1 // pred_fallthru
      _
    // Predicated region
    $region50: #{tpu_custom_call.1} parent=1 // pred_check
      _
    $region51: #{tpu_custom_call.1} parent=1 // pred_check_branch
      %348 = sbr.rel (0) target = $region53
    $region52: #{tpu_custom_call.1} parent=1 // pred_region
      %349 = dma.done [#allocation4], 128
    $region53: #{tpu_custom_call.1} parent=1 // pred_fallthru
      _
    %350 = vsyncpa [#allocation3], 1
    %351 = vsyncpa [#allocation6], 1
    %352 = vsyncpa [#allocation9], 1
    %353 = vsyncpa [#allocation4], 1

</llo_original>
